<compile_context>
chip_gen: v5e
topology: v5e:2x2
jax: 0.10.0
libtpu: 0.0.40
codegen_flags: <defaults>
</compile_context>

<pallas_src>
import jax
import jax.numpy as jnp
from jax.experimental import pallas as pl
from jax.experimental.pallas import tpu as pltpu

LN_EPS = 1e-5                      # nn.LayerNorm default
_LANE = 128                        # lane width
_ROW_ALIGN = 16                    # bf16 native sublane tile (16, 128)
_VMEM_BUDGET = 32 * 1024 * 1024    # conservative working budget (fits v7x 64 MiB)
_VMEM_LIMIT = 64 * 1024 * 1024


# ----------------------------------------------------------------------------
# Small helpers
# ----------------------------------------------------------------------------
def _round_up(v, m):
    return (v + m - 1) // m * m


def _choose_row_tile(n_rows, row_budget_bytes, per_row_bytes):
    cap = (row_budget_bytes // max(per_row_bytes, 1)) // _ROW_ALIGN * _ROW_ALIGN
    cap = max(_ROW_ALIGN, min(512, cap))
    if n_rows <= _ROW_ALIGN:
        return _ROW_ALIGN
    # Aim for >= 2 grid steps so both v7x TensorCores get work.
    half = _round_up(pl.cdiv(n_rows, 2), _ROW_ALIGN)
    return min(cap, half)


def _choose_k_tile(k_pad):
    for cand in (512, 384, 256, 128):
        if cand <= k_pad and k_pad % cand == 0:
            return cand
    return k_pad


def _ln_relu(y, g, beta, d_real):
    """One-pass LayerNorm (over real width d_real) + affine + ReLU, in f32."""
    inv_d = 1.0 / float(d_real)
    s = jnp.sum(y, axis=-1, keepdims=True)
    ss = jnp.sum(y * y, axis=-1, keepdims=True)
    mean = s * inv_d
    var = jnp.maximum(ss * inv_d - mean * mean, 0.0)
    y = (y - mean) * jax.lax.rsqrt(var + LN_EPS)
    y = y * g + beta
    return jnp.maximum(y, 0.0)


# ----------------------------------------------------------------------------
# Fused whole-MLP kernel (grid over row tiles only)
# ----------------------------------------------------------------------------
def _fused_mlp(x_p, padded_params, dims, dpad, tm):
    n_pad = x_p.shape[0]
    num_layers = len(padded_params)
    real_out_dims = dims[1:]

    def kernel(*refs):
        x_ref = refs[0]
        o_ref = refs[-1]
        prefs = refs[1:-1]
        h = x_ref[...].astype(jnp.bfloat16)
        j = 0
        for li in range(num_layers):
            w_ref, b_ref = prefs[j], prefs[j + 1]
            y = jnp.dot(h, w_ref[...], preferred_element_type=jnp.float32)
            y = y + b_ref[...]
            if li < num_layers - 1:
                g_ref, bt_ref = prefs[j + 2], prefs[j + 3]
                j += 4
                h = _ln_relu(y, g_ref[...], bt_ref[...],
                             real_out_dims[li]).astype(jnp.bfloat16)
            else:
                j += 2
                o_ref[...] = y.astype(o_ref.dtype)

    in_specs = [pl.BlockSpec((tm, dpad[0]), lambda i: (i, 0))]
    flat_inputs = [x_p]
    for li, layer in enumerate(padded_params):
        d_in_p, d_out_p = dpad[li], dpad[li + 1]
        in_specs.append(pl.BlockSpec((d_in_p, d_out_p), lambda i: (0, 0)))
        flat_inputs.append(layer[0])
        for p in layer[1:]:                       # bias (+ gamma, beta)
            in_specs.append(pl.BlockSpec((1, d_out_p), lambda i: (0, 0)))
            flat_inputs.append(p)

    return pl.pallas_call(
        kernel,
        out_shape=jax.ShapeDtypeStruct((n_pad, dpad[-1]), jnp.float32),
        grid=(n_pad // tm,),
        in_specs=in_specs,
        out_specs=pl.BlockSpec((tm, dpad[-1]), lambda i: (i, 0)),
        compiler_params=pltpu.CompilerParams(
            dimension_semantics=("parallel",),
            vmem_limit_bytes=_VMEM_LIMIT),
    )(*flat_inputs)


# ----------------------------------------------------------------------------
# Fallback: one layer per pallas_call, with a K-reduction grid axis
# ----------------------------------------------------------------------------
def _layer_call(h, w_p, b_p, g_p, beta_p, *, tm, ln_relu, d_real, out_dtype):
    n_pad, k_pad = h.shape
    d_out_p = w_p.shape[1]
    tk = _choose_k_tile(k_pad)

    def kernel(x_ref, w_ref, b_ref, g_ref, bt_ref, o_ref, acc_ref):
        k = pl.program_id(1)

        @pl.when(k == 0)
        def _init():
            acc_ref[...] = jnp.zeros_like(acc_ref)

        acc_ref[...] += jnp.dot(x_ref[...], w_ref[...],
                                preferred_element_type=jnp.float32)

        @pl.when(k == pl.num_programs(1) - 1)
        def _fin():
            y = acc_ref[...] + b_ref[...]
            if ln_relu:
                y = _ln_relu(y, g_ref[...], bt_ref[...], d_real)
            o_ref[...] = y.astype(o_ref.dtype)

    return pl.pallas_call(
        kernel,
        out_shape=jax.ShapeDtypeStruct((n_pad, d_out_p), out_dtype),
        grid=(n_pad // tm, k_pad // tk),
        in_specs=[
            pl.BlockSpec((tm, tk), lambda i, k: (i, k)),
            pl.BlockSpec((tk, d_out_p), lambda i, k: (k, 0)),
            pl.BlockSpec((1, d_out_p), lambda i, k: (0, 0)),
            pl.BlockSpec((1, d_out_p), lambda i, k: (0, 0)),
            pl.BlockSpec((1, d_out_p), lambda i, k: (0, 0)),
        ],
        out_specs=pl.BlockSpec((tm, d_out_p), lambda i, k: (i, 0)),
        scratch_shapes=[pltpu.VMEM((tm, d_out_p), jnp.float32)],
        compiler_params=pltpu.CompilerParams(
            dimension_semantics=("parallel", "arbitrary"),
            vmem_limit_bytes=_VMEM_LIMIT),
    )(h, w_p, b_p, g_p, beta_p)


# ----------------------------------------------------------------------------
# Forward pass
# ----------------------------------------------------------------------------
def mlp_forward(x, params, *, force_unfused=False):
    """x: [..., input_dim]; params as produced by init_mlp_params."""
    orig_shape = x.shape
    x2 = x.reshape(-1, orig_shape[-1]).astype(jnp.float32)
    n_rows = x2.shape[0]
    num_layers = len(params)

    dims = [x2.shape[1]] + [layer[0].shape[1] for layer in params]
    dpad = [_round_up(d, _LANE) for d in dims]

    # Pad parameters to lane-dense widths; weights in bf16 (MXU-native), the rest f32.
    # gamma/beta pad with ZEROS so padded columns stay exactly 0 after LN affine.
    padded = []
    for i, layer in enumerate(params):
        w, b = layer[0], layer[1]
        w_p = jnp.pad(w, ((0, dpad[i] - dims[i]),
                          (0, dpad[i + 1] - dims[i + 1]))).astype(jnp.bfloat16)
        b_p = jnp.pad(b, ((0, 0), (0, dpad[i + 1] - dims[i + 1]))).astype(jnp.float32)
        if i < num_layers - 1:
            g, beta = layer[2], layer[3]
            g_p = jnp.pad(g, ((0, 0), (0, dpad[i + 1] - dims[i + 1]))).astype(jnp.float32)
            beta_p = jnp.pad(beta, ((0, 0), (0, dpad[i + 1] - dims[i + 1]))).astype(jnp.float32)
            padded.append((w_p, b_p, g_p, beta_p))
        else:
            padded.append((w_p, b_p))

    # Parameter VMEM footprint (pipeline double-buffers constant-index blocks).
    param_bytes = 2 * sum(int(a.size) * a.dtype.itemsize
                          for layer in padded for a in layer)
    use_fused = (not force_unfused) and param_bytes <= _VMEM_BUDGET // 2

    if use_fused:
        # per-row bytes: double-buffered bf16 input, double-buffered f32 output,
        # plus ~2 live f32 activations of the widest layer.
        per_row = 2 * dpad[0] * 2 + 2 * dpad[-1] * 4 + 2 * max(dpad) * 4
        tm = _choose_row_tile(n_rows, _VMEM_BUDGET - param_bytes, per_row)
        n_pad = _round_up(n_rows, tm)
        x_p = jnp.pad(x2, ((0, n_pad - n_rows),
                           (0, dpad[0] - dims[0]))).astype(jnp.bfloat16)
        out = _fused_mlp(x_p, padded, dims, dpad, tm)
    else:
        dmax = max(dpad)
        per_row = 2 * dmax * 2 + 2 * dmax * 4 + dmax * 4   # x, out, acc scratch
        tm = _choose_row_tile(n_rows, _VMEM_BUDGET // 2, per_row)
        n_pad = _round_up(n_rows, tm)
        h = jnp.pad(x2, ((0, n_pad - n_rows),
                         (0, dpad[0] - dims[0]))).astype(jnp.bfloat16)
        for i, layer in enumerate(padded):
            last = (i == num_layers - 1)
            w_p, b_p = layer[0], layer[1]
            if last:  # dummies to keep a uniform kernel signature (unused)
                g_p = jnp.ones((1, dpad[i + 1]), jnp.float32)
                beta_p = jnp.zeros((1, dpad[i + 1]), jnp.float32)
            else:
                g_p, beta_p = layer[2], layer[3]
            h = _layer_call(h, w_p, b_p, g_p, beta_p, tm=tm,
                            ln_relu=not last, d_real=dims[i + 1],
                            out_dtype=jnp.float32 if last else jnp.bfloat16)
        out = h

    out = out[:n_rows, :dims[-1]]
    return out.reshape(*orig_shape[:-1], dims[-1])


# ----------------------------------------------------------------------------
# Parameter construction (deterministic, PyTorch-style uniform init)
# ----------------------------------------------------------------------------
def init_mlp_params(key, input_dim, hidden_dim, output_dim, num_layers):
    dims = [input_dim] + [hidden_dim] * (num_layers - 1) + [output_dim]
    params = []
    for i in range(num_layers):
        d_in, d_out = dims[i], dims[i + 1]
        key, kw, kb = jax.random.split(key, 3)
        bound = 1.0 / jnp.sqrt(d_in)
        w = jax.random.uniform(kw, (d_in, d_out), jnp.float32, -bound, bound)
        b = jax.random.uniform(kb, (1, d_out), jnp.float32, -bound, bound)
        if i < num_layers - 1:
            gamma = jnp.ones((1, d_out), jnp.float32)
            beta = jnp.zeros((1, d_out), jnp.float32)
            params.append((w, b, gamma, beta))
        else:
            params.append((w, b))
    return params


# Pure-JAX reference (mirrors the kernel's bf16 matmul operands, f32 accumulation)
def mlp_reference(x, params):
    h = x.reshape(-1, x.shape[-1]).astype(jnp.float32)
    for (w, b, g, beta) in params[:-1]:
        y = jnp.dot(h.astype(jnp.bfloat16), w.astype(jnp.bfloat16),
                    preferred_element_type=jnp.float32) + b
        mean = jnp.mean(y, axis=-1, keepdims=True)
        var = jnp.mean((y - mean) ** 2, axis=-1, keepdims=True)
        y = (y - mean) / jnp.sqrt(var + LN_EPS) * g + beta
        h = jnp.maximum(y, 0.0)
    w, b = params[-1]
    out = jnp.dot(h.astype(jnp.bfloat16), w.astype(jnp.bfloat16),
                  preferred_element_type=jnp.float32) + b
    return out.reshape(*x.shape[:-1], out.shape[-1])


if __name__ == "__main__":
    # Small config: MLP(input_dim=16, hidden_dim=32, output_dim=8, num_layers=3)
    input_dim, hidden_dim, output_dim, num_layers = 16, 32, 8, 3
    batch, seq = 2, 8

    key = jax.random.PRNGKey(0)
    key, kx = jax.random.split(key)
    x = jax.random.normal(kx, (batch, seq, input_dim), jnp.float32)
    params = init_mlp_params(key, input_dim, hidden_dim, output_dim, num_layers)

    ref = mlp_reference(x, params)

    # Fused single-pallas_call path (used for small/medium parameter footprints).
    out_fused = jax.block_until_ready(mlp_forward(x, params))
    assert out_fused.shape == (batch, seq, output_dim), out_fused.shape
    assert jnp.allclose(out_fused, ref, atol=2e-3, rtol=2e-3), "fused mismatch"

    # Per-layer K-tiled fallback path (used for large layers); exercised here too.
    out_unfused = jax.block_until_ready(mlp_forward(x, params, force_unfused=True))
    assert out_unfused.shape == (batch, seq, output_dim), out_unfused.shape
    assert jnp.allclose(out_unfused, ref, atol=2e-3, rtol=2e-3), "unfused mismatch"

    print("KERNEL_OK")
</pallas_src>

<mosaic_0001>
module attributes {stable_mosaic.version = 11 : i64} {
  func.func @kernel(%arg0: i32, %arg1: memref<16x128xbf16, #tpu.memory_space<vmem>>, %arg2: memref<128x128xbf16, #tpu.memory_space<vmem>>, %arg3: memref<1x128xf32, #tpu.memory_space<vmem>>, %arg4: memref<1x128xf32, #tpu.memory_space<vmem>>, %arg5: memref<1x128xf32, #tpu.memory_space<vmem>>, %arg6: memref<128x128xbf16, #tpu.memory_space<vmem>>, %arg7: memref<1x128xf32, #tpu.memory_space<vmem>>, %arg8: memref<1x128xf32, #tpu.memory_space<vmem>>, %arg9: memref<1x128xf32, #tpu.memory_space<vmem>>, %arg10: memref<128x128xbf16, #tpu.memory_space<vmem>>, %arg11: memref<1x128xf32, #tpu.memory_space<vmem>>, %arg12: memref<16x128xf32, #tpu.memory_space<vmem>>) attributes {dimension_semantics = [#tpu.dimension_semantics<parallel>], iteration_bounds = array<i64: 1>, scalar_prefetch = 0 : i64, scratch_operands = 0 : i64, tpu.core_type = #tpu.core_type<tc>, window_params = [{transform_indices = @transform_0, window_bounds = array<i64: 16, 128>}, {pipeline_mode = #tpu.pipeline_mode<synchronous>, transform_indices = @transform_1, window_bounds = array<i64: 128, 128>}, {pipeline_mode = #tpu.pipeline_mode<synchronous>, transform_indices = @transform_2, window_bounds = array<i64: 1, 128>}, {pipeline_mode = #tpu.pipeline_mode<synchronous>, transform_indices = @transform_3, window_bounds = array<i64: 1, 128>}, {pipeline_mode = #tpu.pipeline_mode<synchronous>, transform_indices = @transform_4, window_bounds = array<i64: 1, 128>}, {pipeline_mode = #tpu.pipeline_mode<synchronous>, transform_indices = @transform_5, window_bounds = array<i64: 128, 128>}, {pipeline_mode = #tpu.pipeline_mode<synchronous>, transform_indices = @transform_6, window_bounds = array<i64: 1, 128>}, {pipeline_mode = #tpu.pipeline_mode<synchronous>, transform_indices = @transform_7, window_bounds = array<i64: 1, 128>}, {pipeline_mode = #tpu.pipeline_mode<synchronous>, transform_indices = @transform_8, window_bounds = array<i64: 1, 128>}, {pipeline_mode = #tpu.pipeline_mode<synchronous>, transform_indices = @transform_9, window_bounds = array<i64: 128, 128>}, {pipeline_mode = #tpu.pipeline_mode<synchronous>, transform_indices = @transform_10, window_bounds = array<i64: 1, 128>}, {transform_indices = @transform_11, window_bounds = array<i64: 16, 128>}]} {
    %c0 = arith.constant 0 : index
    %c0_0 = arith.constant 0 : index
    %0 = vector.load %arg1[%c0, %c0_0] : memref<16x128xbf16, #tpu.memory_space<vmem>>, vector<16x128xbf16>
    %c0_1 = arith.constant 0 : index
    %c0_2 = arith.constant 0 : index
    %1 = vector.load %arg2[%c0_1, %c0_2] : memref<128x128xbf16, #tpu.memory_space<vmem>>, vector<128x128xbf16>
    %cst = arith.constant dense<0.000000e+00> : vector<16x128xf32>
    %2 = tpu.matmul %0, %1, %cst {dimension_numbers = #tpu.dot_dimension_numbers<[1], [0], [0], [1], [0, 0, 1, 1], [], []>} : vector<16x128xbf16>, vector<128x128xbf16>, vector<16x128xf32> -> vector<16x128xf32>
    %c0_3 = arith.constant 0 : index
    %c0_4 = arith.constant 0 : index
    %3 = vector.load %arg3[%c0_3, %c0_4] : memref<1x128xf32, #tpu.memory_space<vmem>>, vector<1x128xf32>
    %4 = vector.broadcast %3 : vector<1x128xf32> to vector<16x128xf32>
    %5 = arith.addf %2, %4 : vector<16x128xf32>
    %c0_5 = arith.constant 0 : index
    %c0_6 = arith.constant 0 : index
    %6 = vector.load %arg4[%c0_5, %c0_6] : memref<1x128xf32, #tpu.memory_space<vmem>>, vector<1x128xf32>
    %c0_7 = arith.constant 0 : index
    %c0_8 = arith.constant 0 : index
    %7 = vector.load %arg5[%c0_7, %c0_8] : memref<1x128xf32, #tpu.memory_space<vmem>>, vector<1x128xf32>
    %cst_9 = arith.constant dense<0.000000e+00> : vector<16xf32>
    %8 = vector.multi_reduction <add>, %5, %cst_9 [1] : vector<16x128xf32> to vector<16xf32>
    %9 = vector.shape_cast %8 : vector<16xf32> to vector<16x1xf32>
    %10 = arith.mulf %5, %5 : vector<16x128xf32>
    %cst_10 = arith.constant dense<0.000000e+00> : vector<16xf32>
    %11 = vector.multi_reduction <add>, %10, %cst_10 [1] : vector<16x128xf32> to vector<16xf32>
    %12 = vector.shape_cast %11 : vector<16xf32> to vector<16x1xf32>
    %cst_11 = arith.constant 3.125000e-02 : f32
    %13 = vector.broadcast %cst_11 : f32 to vector<16x1xf32>
    %14 = arith.mulf %9, %13 : vector<16x1xf32>
    %cst_12 = arith.constant 3.125000e-02 : f32
    %15 = vector.broadcast %cst_12 : f32 to vector<16x1xf32>
    %16 = arith.mulf %12, %15 : vector<16x1xf32>
    %17 = arith.mulf %14, %14 : vector<16x1xf32>
    %18 = arith.subf %16, %17 : vector<16x1xf32>
    %cst_13 = arith.constant 0.000000e+00 : f32
    %19 = vector.broadcast %cst_13 : f32 to vector<16x1xf32>
    %20 = arith.maximumf %18, %19 : vector<16x1xf32>
    %21 = vector.broadcast %14 : vector<16x1xf32> to vector<16x128xf32>
    %22 = arith.subf %5, %21 : vector<16x128xf32>
    %cst_14 = arith.constant 9.99999974E-6 : f32
    %23 = vector.broadcast %cst_14 : f32 to vector<16x1xf32>
    %24 = arith.addf %20, %23 : vector<16x1xf32>
    %25 = math.rsqrt %24 : vector<16x1xf32>
    %26 = vector.broadcast %25 : vector<16x1xf32> to vector<16x128xf32>
    %27 = arith.mulf %22, %26 : vector<16x128xf32>
    %28 = vector.broadcast %6 : vector<1x128xf32> to vector<16x128xf32>
    %29 = arith.mulf %27, %28 : vector<16x128xf32>
    %30 = vector.broadcast %7 : vector<1x128xf32> to vector<16x128xf32>
    %31 = arith.addf %29, %30 : vector<16x128xf32>
    %cst_15 = arith.constant 0.000000e+00 : f32
    %32 = vector.broadcast %cst_15 : f32 to vector<16x128xf32>
    %33 = arith.maximumf %31, %32 : vector<16x128xf32>
    %34 = arith.truncf %33 : vector<16x128xf32> to vector<16x128xbf16>
    %c0_16 = arith.constant 0 : index
    %c0_17 = arith.constant 0 : index
    %35 = vector.load %arg6[%c0_16, %c0_17] : memref<128x128xbf16, #tpu.memory_space<vmem>>, vector<128x128xbf16>
    %cst_18 = arith.constant dense<0.000000e+00> : vector<16x128xf32>
    %36 = tpu.matmul %34, %35, %cst_18 {dimension_numbers = #tpu.dot_dimension_numbers<[1], [0], [0], [1], [0, 0, 1, 1], [], []>} : vector<16x128xbf16>, vector<128x128xbf16>, vector<16x128xf32> -> vector<16x128xf32>
    %c0_19 = arith.constant 0 : index
    %c0_20 = arith.constant 0 : index
    %37 = vector.load %arg7[%c0_19, %c0_20] : memref<1x128xf32, #tpu.memory_space<vmem>>, vector<1x128xf32>
    %38 = vector.broadcast %37 : vector<1x128xf32> to vector<16x128xf32>
    %39 = arith.addf %36, %38 : vector<16x128xf32>
    %c0_21 = arith.constant 0 : index
    %c0_22 = arith.constant 0 : index
    %40 = vector.load %arg8[%c0_21, %c0_22] : memref<1x128xf32, #tpu.memory_space<vmem>>, vector<1x128xf32>
    %c0_23 = arith.constant 0 : index
    %c0_24 = arith.constant 0 : index
    %41 = vector.load %arg9[%c0_23, %c0_24] : memref<1x128xf32, #tpu.memory_space<vmem>>, vector<1x128xf32>
    %cst_25 = arith.constant dense<0.000000e+00> : vector<16xf32>
    %42 = vector.multi_reduction <add>, %39, %cst_25 [1] : vector<16x128xf32> to vector<16xf32>
    %43 = vector.shape_cast %42 : vector<16xf32> to vector<16x1xf32>
    %44 = arith.mulf %39, %39 : vector<16x128xf32>
    %cst_26 = arith.constant dense<0.000000e+00> : vector<16xf32>
    %45 = vector.multi_reduction <add>, %44, %cst_26 [1] : vector<16x128xf32> to vector<16xf32>
    %46 = vector.shape_cast %45 : vector<16xf32> to vector<16x1xf32>
    %cst_27 = arith.constant 3.125000e-02 : f32
    %47 = vector.broadcast %cst_27 : f32 to vector<16x1xf32>
    %48 = arith.mulf %43, %47 : vector<16x1xf32>
    %cst_28 = arith.constant 3.125000e-02 : f32
    %49 = vector.broadcast %cst_28 : f32 to vector<16x1xf32>
    %50 = arith.mulf %46, %49 : vector<16x1xf32>
    %51 = arith.mulf %48, %48 : vector<16x1xf32>
    %52 = arith.subf %50, %51 : vector<16x1xf32>
    %cst_29 = arith.constant 0.000000e+00 : f32
    %53 = vector.broadcast %cst_29 : f32 to vector<16x1xf32>
    %54 = arith.maximumf %52, %53 : vector<16x1xf32>
    %55 = vector.broadcast %48 : vector<16x1xf32> to vector<16x128xf32>
    %56 = arith.subf %39, %55 : vector<16x128xf32>
    %cst_30 = arith.constant 9.99999974E-6 : f32
    %57 = vector.broadcast %cst_30 : f32 to vector<16x1xf32>
    %58 = arith.addf %54, %57 : vector<16x1xf32>
    %59 = math.rsqrt %58 : vector<16x1xf32>
    %60 = vector.broadcast %59 : vector<16x1xf32> to vector<16x128xf32>
    %61 = arith.mulf %56, %60 : vector<16x128xf32>
    %62 = vector.broadcast %40 : vector<1x128xf32> to vector<16x128xf32>
    %63 = arith.mulf %61, %62 : vector<16x128xf32>
    %64 = vector.broadcast %41 : vector<1x128xf32> to vector<16x128xf32>
    %65 = arith.addf %63, %64 : vector<16x128xf32>
    %cst_31 = arith.constant 0.000000e+00 : f32
    %66 = vector.broadcast %cst_31 : f32 to vector<16x128xf32>
    %67 = arith.maximumf %65, %66 : vector<16x128xf32>
    %68 = arith.truncf %67 : vector<16x128xf32> to vector<16x128xbf16>
    %c0_32 = arith.constant 0 : index
    %c0_33 = arith.constant 0 : index
    %69 = vector.load %arg10[%c0_32, %c0_33] : memref<128x128xbf16, #tpu.memory_space<vmem>>, vector<128x128xbf16>
    %cst_34 = arith.constant dense<0.000000e+00> : vector<16x128xf32>
    %70 = tpu.matmul %68, %69, %cst_34 {dimension_numbers = #tpu.dot_dimension_numbers<[1], [0], [0], [1], [0, 0, 1, 1], [], []>} : vector<16x128xbf16>, vector<128x128xbf16>, vector<16x128xf32> -> vector<16x128xf32>
    %c0_35 = arith.constant 0 : index
    %c0_36 = arith.constant 0 : index
    %71 = vector.load %arg11[%c0_35, %c0_36] : memref<1x128xf32, #tpu.memory_space<vmem>>, vector<1x128xf32>
    %72 = vector.broadcast %71 : vector<1x128xf32> to vector<16x128xf32>
    %73 = arith.addf %70, %72 : vector<16x128xf32>
    %c0_37 = arith.constant 0 : index
    %c0_38 = arith.constant 0 : index
    %74 = vector.load %arg12[%c0_37, %c0_38] : memref<16x128xf32, #tpu.memory_space<vmem>>, vector<16x128xf32>
    tpu.vector_store %arg12[%c0_37, %c0_38], %73 {strides = array<i32>} : memref<16x128xf32, #tpu.memory_space<vmem>>, vector<16x128xf32>,
    return
  }
  func.func @transform_0(%arg0: i32) -> (i32, i32) {
    %c0_i32 = arith.constant 0 : i32
    %c0_i32_0 = arith.constant 0 : i32
    return %arg0, %c0_i32 : i32, i32
  }
  func.func @transform_1(%arg0: i32) -> (i32, i32) {
    %c0_i32 = arith.constant 0 : i32
    %c0_i32_0 = arith.constant 0 : i32
    %c0_i32_1 = arith.constant 0 : i32
    return %c0_i32, %c0_i32_0 : i32, i32
  }
  func.func @transform_2(%arg0: i32) -> (i32, i32) {
    %c0_i32 = arith.constant 0 : i32
    %c0_i32_0 = arith.constant 0 : i32
    %c0_i32_1 = arith.constant 0 : i32
    return %c0_i32, %c0_i32_0 : i32, i32
  }
  func.func @transform_3(%arg0: i32) -> (i32, i32) {
    %c0_i32 = arith.constant 0 : i32
    %c0_i32_0 = arith.constant 0 : i32
    %c0_i32_1 = arith.constant 0 : i32
    return %c0_i32, %c0_i32_0 : i32, i32
  }
  func.func @transform_4(%arg0: i32) -> (i32, i32) {
    %c0_i32 = arith.constant 0 : i32
    %c0_i32_0 = arith.constant 0 : i32
    %c0_i32_1 = arith.constant 0 : i32
    return %c0_i32, %c0_i32_0 : i32, i32
  }
  func.func @transform_5(%arg0: i32) -> (i32, i32) {
    %c0_i32 = arith.constant 0 : i32
    %c0_i32_0 = arith.constant 0 : i32
    %c0_i32_1 = arith.constant 0 : i32
    return %c0_i32, %c0_i32_0 : i32, i32
  }
  func.func @transform_6(%arg0: i32) -> (i32, i32) {
    %c0_i32 = arith.constant 0 : i32
    %c0_i32_0 = arith.constant 0 : i32
    %c0_i32_1 = arith.constant 0 : i32
    return %c0_i32, %c0_i32_0 : i32, i32
  }
  func.func @transform_7(%arg0: i32) -> (i32, i32) {
    %c0_i32 = arith.constant 0 : i32
    %c0_i32_0 = arith.constant 0 : i32
    %c0_i32_1 = arith.constant 0 : i32
    return %c0_i32, %c0_i32_0 : i32, i32
  }
  func.func @transform_8(%arg0: i32) -> (i32, i32) {
    %c0_i32 = arith.constant 0 : i32
    %c0_i32_0 = arith.constant 0 : i32
    %c0_i32_1 = arith.constant 0 : i32
    return %c0_i32, %c0_i32_0 : i32, i32
  }
  func.func @transform_9(%arg0: i32) -> (i32, i32) {
    %c0_i32 = arith.constant 0 : i32
    %c0_i32_0 = arith.constant 0 : i32
    %c0_i32_1 = arith.constant 0 : i32
    return %c0_i32, %c0_i32_0 : i32, i32
  }
  func.func @transform_10(%arg0: i32) -> (i32, i32) {
    %c0_i32 = arith.constant 0 : i32
    %c0_i32_0 = arith.constant 0 : i32
    %c0_i32_1 = arith.constant 0 : i32
    return %c0_i32, %c0_i32_0 : i32, i32
  }
  func.func @transform_11(%arg0: i32) -> (i32, i32) {
    %c0_i32 = arith.constant 0 : i32
    %c0_i32_0 = arith.constant 0 : i32
    return %arg0, %c0_i32 : i32, i32
  }
}

</mosaic_0001>

<llo_original>
// kernel: tpu_custom_call.1
$region0: #{tpu_custom_call.1}
  #allocation0 [shape = 'u32[]', space=smem, size = 0x4, offset = 0x4, fixed_abs, tag = 'smem constant byte address 0x4 - core index']
  #allocation1 [shape = 'u32[72,128]{1,0:T(1,128)}', space=vmem, size = 0x9000, scoped, tag = 'internal scratch']
  %s0 = inlined_call_operand.hbm [shape: bf16[16,128], index: 0, kind: input, shape index: {}]
  %s1 = inlined_call_operand.hbm [shape: bf16[128,128], index: 1, kind: input, shape index: {}]
  %s2 = inlined_call_operand.vmem [shape: f32[1,128], index: 2, kind: input, shape index: {}]
  %s3 = inlined_call_operand.vmem [shape: f32[1,128], index: 3, kind: input, shape index: {}]
  %s4 = inlined_call_operand.vmem [shape: f32[1,128], index: 4, kind: input, shape index: {}]
  %s5 = inlined_call_operand.hbm [shape: bf16[128,128], index: 5, kind: input, shape index: {}]
  %s6 = inlined_call_operand.vmem [shape: f32[1,128], index: 6, kind: input, shape index: {}]
  %s7 = inlined_call_operand.vmem [shape: f32[1,128], index: 7, kind: input, shape index: {}]
  %s8 = inlined_call_operand.vmem [shape: f32[1,128], index: 8, kind: input, shape index: {}]
  %s9 = inlined_call_operand.hbm [shape: bf16[128,128], index: 9, kind: input, shape index: {}]
  %s10 = inlined_call_operand.vmem [shape: f32[1,128], index: 10, kind: input, shape index: {}]
  %s11 = inlined_call_operand.hbm [shape: f32[16,128], index: 11, kind: output, shape index: {}]
  %s12 = sld [smem:[#allocation0]]
  $region70: #{tpu_custom_call.1} parent=0
    _
  %s14 = ssub.s32 1, %s12
  %s15 = scalar_select 0, %s14, %s12
  $region1: #{tpu_custom_call.1} parent=0
    #allocation2 [shape = 'u8[4096]{0}', space=vmem, size = 0x1000, scoped, tag = 'input window, operand 0, single buffered']
    #allocation3 [shape = 's32[1]{0}', space=sflag, size = 0x4, scoped, tag = 'scoped memory for tpu_custom_call.1']
    #allocation4 [shape = 's32[1]{0}', space=sflag, size = 0x4, scoped, tag = 'scoped memory for tpu_custom_call.1']
    #allocation5 [shape = 'u8[32768]{0}', space=vmem, size = 0x8000, scoped, tag = 'input window, operand 1, single buffered']
    #allocation6 [shape = 's32[1]{0}', space=sflag, size = 0x4, scoped, tag = 'scoped memory for tpu_custom_call.1']
    #allocation7 [shape = 'u8[32768]{0}', space=vmem, size = 0x8000, scoped, tag = 'input window, operand 5, single buffered']
    #allocation8 [shape = 'u8[32768]{0}', space=vmem, size = 0x8000, scoped, tag = 'input window, operand 9, single buffered']
    #allocation9 [shape = 's32[1]{0}', space=sflag, size = 0x4, scoped, tag = 'scoped memory for tpu_custom_call.1']
    #allocation10 [shape = 'u8[8192]{0}', space=vmem, size = 0x2000, scoped, tag = 'output window, operand 0, single buffered']
    %16 = vsyncpa [#allocation3], 0
    %17 = vsyncpa [#allocation6], 0
    %18 = vsyncpa [#allocation9], 0
    %19 = vsyncpa [#allocation4], 0
    // Predicated region
    $region2: #{tpu_custom_call.1} parent=1 // pred_check
      _
    $region3: #{tpu_custom_call.1} parent=1 // pred_check_branch
      %21 = sbr.rel (0) target = $region5
    $region4: #{tpu_custom_call.1} parent=1 // pred_region
      %23 = vsyncadd [#allocation3], 0
      %s24 = sshll.u32 %s0, 4
      %s25 = int_to_ptr.hbm [resolvable:$true] %s24
      %s26 = sshll.u32 [#allocation2], 4
      %s27 = int_to_ptr.vmem [resolvable:$true] %s26
      %32 = dma.hbm_to_vmem [thread:$0]  %s25, 128, %s27, [#allocation3], 64, 64, 4
    $region5: #{tpu_custom_call.1} parent=1 // pred_fallthru
      _
    // Predicated region
    $region6: #{tpu_custom_call.1} parent=1 // pred_check
      _
    $region7: #{tpu_custom_call.1} parent=1 // pred_check_branch
      %34 = sbr.rel (0) target = $region9
    $region8: #{tpu_custom_call.1} parent=1 // pred_region
      %36 = vsyncadd [#allocation6], 0
      %s37 = sshll.u32 %s1, 4
      %s38 = int_to_ptr.hbm [resolvable:$true] %s37
      %s39 = sshll.u32 [#allocation5], 4
      %s40 = int_to_ptr.vmem [resolvable:$true] %s39
      %45 = dma.hbm_to_vmem [thread:$0]  %s38, 1024, %s40, [#allocation6], 64, 64, 4
    $region9: #{tpu_custom_call.1} parent=1 // pred_fallthru
      _
    // Predicated region
    $region10: #{tpu_custom_call.1} parent=1 // pred_check
      _
    $region11: #{tpu_custom_call.1} parent=1 // pred_check_branch
      %47 = sbr.rel (0) target = $region13
    $region12: #{tpu_custom_call.1} parent=1 // pred_region
      _
    $region13: #{tpu_custom_call.1} parent=1 // pred_fallthru
      _
    // Predicated region
    $region14: #{tpu_custom_call.1} parent=1 // pred_check
      _
    $region15: #{tpu_custom_call.1} parent=1 // pred_check_branch
      %49 = sbr.rel (0) target = $region17
    $region16: #{tpu_custom_call.1} parent=1 // pred_region
      _
    $region17: #{tpu_custom_call.1} parent=1 // pred_fallthru
      _
    // Predicated region
    $region18: #{tpu_custom_call.1} parent=1 // pred_check
      _
    $region19: #{tpu_custom_call.1} parent=1 // pred_check_branch
      %51 = sbr.rel (0) target = $region21
    $region20: #{tpu_custom_call.1} parent=1 // pred_region
      _
    $region21: #{tpu_custom_call.1} parent=1 // pred_fallthru
      _
    // Predicated region
    $region22: #{tpu_custom_call.1} parent=1 // pred_check
      _
    $region23: #{tpu_custom_call.1} parent=1 // pred_check_branch
      %53 = sbr.rel (0) target = $region25
    $region24: #{tpu_custom_call.1} parent=1 // pred_region
      %55 = vsyncadd [#allocation6], 0
      %s56 = sshll.u32 %s5, 4
      %s57 = int_to_ptr.hbm [resolvable:$true] %s56
      %s58 = sshll.u32 [#allocation7], 4
      %s59 = int_to_ptr.vmem [resolvable:$true] %s58
      %64 = dma.hbm_to_vmem [thread:$0]  %s57, 1024, %s59, [#allocation6], 64, 64, 4
    $region25: #{tpu_custom_call.1} parent=1 // pred_fallthru
      _
    // Predicated region
    $region26: #{tpu_custom_call.1} parent=1 // pred_check
      _
    $region27: #{tpu_custom_call.1} parent=1 // pred_check_branch
      %66 = sbr.rel (0) target = $region29
    $region28: #{tpu_custom_call.1} parent=1 // pred_region
      _
    $region29: #{tpu_custom_call.1} parent=1 // pred_fallthru
      _
    // Predicated region
    $region30: #{tpu_custom_call.1} parent=1 // pred_check
      _
    $region31: #{tpu_custom_call.1} parent=1 // pred_check_branch
      %68 = sbr.rel (0) target = $region33
    $region32: #{tpu_custom_call.1} parent=1 // pred_region
      _
    $region33: #{tpu_custom_call.1} parent=1 // pred_fallthru
      _
    // Predicated region
    $region34: #{tpu_custom_call.1} parent=1 // pred_check
      _
    $region35: #{tpu_custom_call.1} parent=1 // pred_check_branch
      %70 = sbr.rel (0) target = $region37
    $region36: #{tpu_custom_call.1} parent=1 // pred_region
      _
    $region37: #{tpu_custom_call.1} parent=1 // pred_fallthru
      _
    // Predicated region
    $region38: #{tpu_custom_call.1} parent=1 // pred_check
      _
    $region39: #{tpu_custom_call.1} parent=1 // pred_check_branch
      %72 = sbr.rel (0) target = $region41
    $region40: #{tpu_custom_call.1} parent=1 // pred_region
      %74 = vsyncadd [#allocation9], 0
      %s75 = sshll.u32 %s9, 4
      %s76 = int_to_ptr.hbm [resolvable:$true] %s75
      %s77 = sshll.u32 [#allocation8], 4
      %s78 = int_to_ptr.vmem [resolvable:$true] %s77
      %83 = dma.hbm_to_vmem [thread:$0]  %s76, 1024, %s78, [#allocation9], 64, 64, 4
    $region41: #{tpu_custom_call.1} parent=1 // pred_fallthru
      _
    // Predicated region
    $region42: #{tpu_custom_call.1} parent=1 // pred_check
      _
    $region43: #{tpu_custom_call.1} parent=1 // pred_check_branch
      %85 = sbr.rel (0) target = $region45
    $region44: #{tpu_custom_call.1} parent=1 // pred_region
      _
    $region45: #{tpu_custom_call.1} parent=1 // pred_fallthru
      _
    // Predicated region
    $region46: #{tpu_custom_call.1} parent=1 // pred_check
      _
    $region47: #{tpu_custom_call.1} parent=1 // pred_check_branch
      %87 = sbr.rel (0) target = $region49
    $region48: #{tpu_custom_call.1} parent=1 // pred_region
      %89 = dma.done [#allocation3], 128
    $region49: #{tpu_custom_call.1} parent=1 // pred_fallthru
      _
    // Predicated region
    $region50: #{tpu_custom_call.1} parent=1 // pred_check
      _
    $region51: #{tpu_custom_call.1} parent=1 // pred_check_branch
      %91 = sbr.rel (0) target = $region53
    $region52: #{tpu_custom_call.1} parent=1 // pred_region
      %93 = dma.done [#allocation6], 1024
    $region53: #{tpu_custom_call.1} parent=1 // pred_fallthru
      _
    // Predicated region
    $region54: #{tpu_custom_call.1} parent=1 // pred_check
      _
    $region55: #{tpu_custom_call.1} parent=1 // pred_check_branch
      %95 = sbr.rel (0) target = $region57
    $region56: #{tpu_custom_call.1} parent=1 // pred_region
      %97 = dma.done [#allocation6], 1024
    $region57: #{tpu_custom_call.1} parent=1 // pred_fallthru
      _
    // Predicated region
    $region58: #{tpu_custom_call.1} parent=1 // pred_check
      _
    $region59: #{tpu_custom_call.1} parent=1 // pred_check_branch
      %99 = sbr.rel (0) target = $region61
    $region60: #{tpu_custom_call.1} parent=1 // pred_region
      %101 = dma.done [#allocation9], 1024
    $region61: #{tpu_custom_call.1} parent=1 // pred_fallthru
      _
    %v102 = vld [vmem:[#allocation2] sm:$0xf]
    %v103 = vld [vmem:[#allocation2 + $0x4] sm:$0xf]
    %v104 = vld [vmem:[#allocation5] sm:$0xf]
    %v105 = vld [vmem:[#allocation5 + $0x4] sm:$0xf]
    %v106 = vld [vmem:[#allocation5 + $0x8] sm:$0xf]
    %v107 = vld [vmem:[#allocation5 + $0xc] sm:$0xf]
    %v108 = vld [vmem:[#allocation5 + $0x10] sm:$0xf]
    %v109 = vld [vmem:[#allocation5 + $0x14] sm:$0xf]
    %v110 = vld [vmem:[#allocation5 + $0x18] sm:$0xf]
    %v111 = vld [vmem:[#allocation5 + $0x1c] sm:$0xf]
    %v112 = vld [vmem:[#allocation5 + $0x20] sm:$0xf]
    %v113 = vld [vmem:[#allocation5 + $0x24] sm:$0xf]
    %v114 = vld [vmem:[#allocation5 + $0x28] sm:$0xf]
    %v115 = vld [vmem:[#allocation5 + $0x2c] sm:$0xf]
    %v116 = vld [vmem:[#allocation5 + $0x30] sm:$0xf]
    %v117 = vld [vmem:[#allocation5 + $0x34] sm:$0xf]
    %v118 = vld [vmem:[#allocation5 + $0x38] sm:$0xf]
    %v119 = vld [vmem:[#allocation5 + $0x3c] sm:$0xf]
    %v120 = vld [vmem:[%s2] sm:$0x1]
    %v122 = vperm.slane %v120, 0
    %v126 = vunpack.c.l.b16 %v102
    %v127 = vunpack.c.l.b16 %v103
    %v128 = vpack.c.b16 %v127, %v126
    %v146 = vunpack.c.l.b16 %v104
    %v147 = vunpack.c.l.b16 %v105
    %v148 = vunpack.c.l.b16 %v106
    %v149 = vunpack.c.l.b16 %v107
    %v150 = vunpack.c.l.b16 %v108
    %v151 = vunpack.c.l.b16 %v109
    %v152 = vunpack.c.l.b16 %v110
    %v153 = vunpack.c.l.b16 %v111
    %v154 = vunpack.c.l.b16 %v112
    %v155 = vunpack.c.l.b16 %v113
    %v156 = vunpack.c.l.b16 %v114
    %v157 = vunpack.c.l.b16 %v115
    %v158 = vunpack.c.l.b16 %v116
    %v159 = vunpack.c.l.b16 %v117
    %v160 = vunpack.c.l.b16 %v118
    %v161 = vunpack.c.l.b16 %v119
    %v162 = vpack.c.b16 %v147, %v146
    %v163 = vpack.c.b16 %v149, %v148
    %v164 = vpack.c.b16 %v151, %v150
    %v165 = vpack.c.b16 %v153, %v152
    %v166 = vpack.c.b16 %v155, %v154
    %v167 = vpack.c.b16 %v157, %v156
    %v168 = vpack.c.b16 %v159, %v158
    %v169 = vpack.c.b16 %v161, %v160
    %178 = vmatpush.bf16.msra.mxu0 %v169
    %179 = vmatpush.bf16.msra.mxu0 %v168
    %180 = vmatpush.bf16.msra.mxu0 %v167
    %181 = vmatpush.bf16.msra.mxu0 %v166
    %182 = vmatpush.bf16.msra.mxu0 %v165
    %183 = vmatpush.bf16.msra.mxu0 %v164
    %184 = vmatpush.bf16.msra.mxu0 %v163
    %185 = vmatpush.bf16.msra.mxu0 %v162
    %186 = vmatmul.bf16.gmra.mxu0 %v128
    %v187 = vpop.f32.mrf.mxu0
    %v188 = vadd.f32 %v122, %v187
    %v189 = vpop.f32.mrf.mxu0
    %v190 = vadd.f32 %v122, %v189
    %191 = vdwg.mxu0
    %v192 = vld [vmem:[%s3] sm:$0x1]
    %v193 = vld [vmem:[%s4] sm:$0x1]
    %194 = vadd.xlane.f32.xlu0 %v188
    %v195 = vpop.xlane.xlu0 %194
    %196 = vadd.xlane.f32.xlu0 %v190
    %v197 = vpop.xlane.xlu0 %196
    %v198 = vmul.f32 %v188, %v188
    %v199 = vmul.f32 %v190, %v190
    %200 = vadd.xlane.f32.xlu0 %v198
    %v201 = vpop.xlane.xlu0 %200
    %202 = vadd.xlane.f32.xlu0 %v199
    %v203 = vpop.xlane.xlu0 %202
    %v204 = vmul.f32 %v195, 0.03125
    %v205 = vmul.f32 %v197, 0.03125
    %v206 = vmul.f32 %v201, 0.03125
    %v207 = vmul.f32 %v203, 0.03125
    %v208 = vmul.f32 %v204, %v204
    %v209 = vmul.f32 %v205, %v205
    %v210 = vsub.f32 %v206, %v208
    %v211 = vsub.f32 %v207, %v209
    %v212 = vmax.f32 %v210, 0.0
    %v213 = vmax.f32 %v211, 0.0
    %v214 = vsub.f32 %v188, %v204
    %v215 = vsub.f32 %v190, %v205
    %v216 = vadd.f32 %v212, 1e-05
    %v217 = vadd.f32 %v213, 1e-05
    %v218 = vrsqrt.pop %v216
    %v219 = vmul.f32 %v218, %v216
    %v220 = vmul.f32 %v219, %v218
    %v221 = vmul.f32 0.5, %v220
    %v222 = vsub.f32 1.5, %v221
    %v223 = vmul.f32 %v218, %v222
    %vm224 = vweird.f32 %v216
    %vm225 = vweird.f32 %v218
    %vm226 = vmor %vm224, %vm225
    %v227 = vsel %vm226, %v218, %v223
    %v228 = vrsqrt.pop %v217
    %v229 = vmul.f32 %v228, %v217
    %v230 = vmul.f32 %v229, %v228
    %v231 = vmul.f32 0.5, %v230
    %v232 = vsub.f32 1.5, %v231
    %v233 = vmul.f32 %v228, %v232
    %vm234 = vweird.f32 %v217
    %vm235 = vweird.f32 %v228
    %vm236 = vmor %vm234, %vm235
    %v237 = vsel %vm236, %v228, %v233
    %v238 = vmul.f32 %v214, %v227
    %v239 = vmul.f32 %v215, %v237
    %v241 = vperm.slane %v192, 0
    %v243 = vmul.f32 %v238, %v241
    %v244 = vmul.f32 %v239, %v241
    %v246 = vperm.slane %v193, 0
    %v248 = vadd.f32 %v243, %v246
    %v249 = vadd.f32 %v244, %v246
    %v250 = vmax.f32 %v248, 0.0
    %v251 = vmax.f32 %v249, 0.0
    %v252 = vpack.c.bf16 %v251, %v250
    %v253 = vld [vmem:[#allocation7] sm:$0xf]
    %v254 = vld [vmem:[#allocation7 + $0x4] sm:$0xf]
    %v255 = vld [vmem:[#allocation7 + $0x8] sm:$0xf]
    %v256 = vld [vmem:[#allocation7 + $0xc] sm:$0xf]
    %v257 = vld [vmem:[#allocation7 + $0x10] sm:$0xf]
    %v258 = vld [vmem:[#allocation7 + $0x14] sm:$0xf]
    %v259 = vld [vmem:[#allocation7 + $0x18] sm:$0xf]
    %v260 = vld [vmem:[#allocation7 + $0x1c] sm:$0xf]
    %v261 = vld [vmem:[#allocation7 + $0x20] sm:$0xf]
    %v262 = vld [vmem:[#allocation7 + $0x24] sm:$0xf]
    %v263 = vld [vmem:[#allocation7 + $0x28] sm:$0xf]
    %v264 = vld [vmem:[#allocation7 + $0x2c] sm:$0xf]
    %v265 = vld [vmem:[#allocation7 + $0x30] sm:$0xf]
    %v266 = vld [vmem:[#allocation7 + $0x34] sm:$0xf]
    %v267 = vld [vmem:[#allocation7 + $0x38] sm:$0xf]
    %v268 = vld [vmem:[#allocation7 + $0x3c] sm:$0xf]
    %v269 = vld [vmem:[%s6] sm:$0x1]
    %v271 = vperm.slane %v269, 0
    %v289 = vunpack.c.l.b16 %v253
    %v290 = vunpack.c.l.b16 %v254
    %v291 = vunpack.c.l.b16 %v255
    %v292 = vunpack.c.l.b16 %v256
    %v293 = vunpack.c.l.b16 %v257
    %v294 = vunpack.c.l.b16 %v258
    %v295 = vunpack.c.l.b16 %v259
    %v296 = vunpack.c.l.b16 %v260
    %v297 = vunpack.c.l.b16 %v261
    %v298 = vunpack.c.l.b16 %v262
    %v299 = vunpack.c.l.b16 %v263
    %v300 = vunpack.c.l.b16 %v264
    %v301 = vunpack.c.l.b16 %v265
    %v302 = vunpack.c.l.b16 %v266
    %v303 = vunpack.c.l.b16 %v267
    %v304 = vunpack.c.l.b16 %v268
    %v305 = vpack.c.b16 %v290, %v289
    %v306 = vpack.c.b16 %v292, %v291
    %v307 = vpack.c.b16 %v294, %v293
    %v308 = vpack.c.b16 %v296, %v295
    %v309 = vpack.c.b16 %v298, %v297
    %v310 = vpack.c.b16 %v300, %v299
    %v311 = vpack.c.b16 %v302, %v301
    %v312 = vpack.c.b16 %v304, %v303
    %321 = vmatpush.bf16.msra.mxu0 %v312
    %322 = vmatpush.bf16.msra.mxu0 %v311
    %323 = vmatpush.bf16.msra.mxu0 %v310
    %324 = vmatpush.bf16.msra.mxu0 %v309
    %325 = vmatpush.bf16.msra.mxu0 %v308
    %326 = vmatpush.bf16.msra.mxu0 %v307
    %327 = vmatpush.bf16.msra.mxu0 %v306
    %328 = vmatpush.bf16.msra.mxu0 %v305
    %329 = vmatmul.bf16.gmra.mxu0 %v252
    %v330 = vpop.f32.mrf.mxu0
    %v331 = vadd.f32 %v271, %v330
    %v332 = vpop.f32.mrf.mxu0
    %v333 = vadd.f32 %v271, %v332
    %334 = vdwg.mxu0
    %v335 = vld [vmem:[%s7] sm:$0x1]
    %v336 = vld [vmem:[%s8] sm:$0x1]
    %337 = vadd.xlane.f32.xlu0 %v331
    %v338 = vpop.xlane.xlu0 %337
    %339 = vadd.xlane.f32.xlu0 %v333
    %v340 = vpop.xlane.xlu0 %339
    %v341 = vmul.f32 %v331, %v331
    %v342 = vmul.f32 %v333, %v333
    %343 = vadd.xlane.f32.xlu0 %v341
    %v344 = vpop.xlane.xlu0 %343
    %345 = vadd.xlane.f32.xlu0 %v342
    %v346 = vpop.xlane.xlu0 %345
    %v347 = vmul.f32 %v338, 0.03125
    %v348 = vmul.f32 %v340, 0.03125
    %v349 = vmul.f32 %v344, 0.03125
    %v350 = vmul.f32 %v346, 0.03125
    %v351 = vmul.f32 %v347, %v347
    %v352 = vmul.f32 %v348, %v348
    %v353 = vsub.f32 %v349, %v351
    %v354 = vsub.f32 %v350, %v352
    %v355 = vmax.f32 %v353, 0.0
    %v356 = vmax.f32 %v354, 0.0
    %v357 = vsub.f32 %v331, %v347
    %v358 = vsub.f32 %v333, %v348
    %v359 = vadd.f32 %v355, 1e-05
    %v360 = vadd.f32 %v356, 1e-05
    %v361 = vrsqrt.pop %v359
    %v362 = vmul.f32 %v361, %v359
    %v363 = vmul.f32 %v362, %v361
    %v364 = vmul.f32 0.5, %v363
    %v365 = vsub.f32 1.5, %v364
    %v366 = vmul.f32 %v361, %v365
    %vm367 = vweird.f32 %v359
    %vm368 = vweird.f32 %v361
    %vm369 = vmor %vm367, %vm368
    %v370 = vsel %vm369, %v361, %v366
    %v371 = vrsqrt.pop %v360
    %v372 = vmul.f32 %v371, %v360
    %v373 = vmul.f32 %v372, %v371
    %v374 = vmul.f32 0.5, %v373
    %v375 = vsub.f32 1.5, %v374
    %v376 = vmul.f32 %v371, %v375
    %vm377 = vweird.f32 %v360
    %vm378 = vweird.f32 %v371
    %vm379 = vmor %vm377, %vm378
    %v380 = vsel %vm379, %v371, %v376
    %v381 = vmul.f32 %v357, %v370
    %v382 = vmul.f32 %v358, %v380
    %v384 = vperm.slane %v335, 0
    %v386 = vmul.f32 %v381, %v384
    %v387 = vmul.f32 %v382, %v384
    %v389 = vperm.slane %v336, 0
    %v391 = vadd.f32 %v386, %v389
    %v392 = vadd.f32 %v387, %v389
    %v393 = vmax.f32 %v391, 0.0
    %v394 = vmax.f32 %v392, 0.0
    %v395 = vpack.c.bf16 %v394, %v393
    %v396 = vld [vmem:[#allocation8] sm:$0xf]
    %v397 = vld [vmem:[#allocation8 + $0x4] sm:$0xf]
    %v398 = vld [vmem:[#allocation8 + $0x8] sm:$0xf]
    %v399 = vld [vmem:[#allocation8 + $0xc] sm:$0xf]
    %v400 = vld [vmem:[#allocation8 + $0x10] sm:$0xf]
    %v401 = vld [vmem:[#allocation8 + $0x14] sm:$0xf]
    %v402 = vld [vmem:[#allocation8 + $0x18] sm:$0xf]
    %v403 = vld [vmem:[#allocation8 + $0x1c] sm:$0xf]
    %v404 = vld [vmem:[#allocation8 + $0x20] sm:$0xf]
    %v405 = vld [vmem:[#allocation8 + $0x24] sm:$0xf]
    %v406 = vld [vmem:[#allocation8 + $0x28] sm:$0xf]
    %v407 = vld [vmem:[#allocation8 + $0x2c] sm:$0xf]
    %v408 = vld [vmem:[#allocation8 + $0x30] sm:$0xf]
    %v409 = vld [vmem:[#allocation8 + $0x34] sm:$0xf]
    %v410 = vld [vmem:[#allocation8 + $0x38] sm:$0xf]
    %v411 = vld [vmem:[#allocation8 + $0x3c] sm:$0xf]
    %v412 = vld [vmem:[%s10] sm:$0x1]
    %v414 = vperm.slane %v412, 0
    %v432 = vunpack.c.l.b16 %v396
    %v433 = vunpack.c.l.b16 %v397
    %v434 = vunpack.c.l.b16 %v398
    %v435 = vunpack.c.l.b16 %v399
    %v436 = vunpack.c.l.b16 %v400
    %v437 = vunpack.c.l.b16 %v401
    %v438 = vunpack.c.l.b16 %v402
    %v439 = vunpack.c.l.b16 %v403
    %v440 = vunpack.c.l.b16 %v404
    %v441 = vunpack.c.l.b16 %v405
    %v442 = vunpack.c.l.b16 %v406
    %v443 = vunpack.c.l.b16 %v407
    %v444 = vunpack.c.l.b16 %v408
    %v445 = vunpack.c.l.b16 %v409
    %v446 = vunpack.c.l.b16 %v410
    %v447 = vunpack.c.l.b16 %v411
    %v448 = vpack.c.b16 %v433, %v432
    %v449 = vpack.c.b16 %v435, %v434
    %v450 = vpack.c.b16 %v437, %v436
    %v451 = vpack.c.b16 %v439, %v438
    %v452 = vpack.c.b16 %v441, %v440
    %v453 = vpack.c.b16 %v443, %v442
    %v454 = vpack.c.b16 %v445, %v444
    %v455 = vpack.c.b16 %v447, %v446
    %464 = vmatpush.bf16.msra.mxu0 %v455
    %465 = vmatpush.bf16.msra.mxu0 %v454
    %466 = vmatpush.bf16.msra.mxu0 %v453
    %467 = vmatpush.bf16.msra.mxu0 %v452
    %468 = vmatpush.bf16.msra.mxu0 %v451
    %469 = vmatpush.bf16.msra.mxu0 %v450
    %470 = vmatpush.bf16.msra.mxu0 %v449
    %471 = vmatpush.bf16.msra.mxu0 %v448
    %472 = vmatmul.bf16.gmra.mxu0 %v395
    %v473 = vpop.f32.mrf.mxu0
    %v474 = vadd.f32 %v414, %v473
    %v475 = vpop.f32.mrf.mxu0
    %v476 = vadd.f32 %v414, %v475
    %477 = vdwg.mxu0
    %478 = vst [vmem:[#allocation10] sm:$0xff] %v474
    %479 = vst [vmem:[#allocation10 + $0x8] sm:$0xff] %v476
    // Predicated region
    $region62: #{tpu_custom_call.1} parent=1 // pred_check
      _
    $region63: #{tpu_custom_call.1} parent=1 // pred_check_branch
      %481 = sbr.rel (0) target = $region65
    $region64: #{tpu_custom_call.1} parent=1 // pred_region
      %483 = vsyncadd [#allocation4], 0
      %s484 = sshll.u32 [#allocation10], 4
      %s485 = int_to_ptr.vmem [resolvable:$true] %s484
      %s486 = sshll.u32 %s11, 4
      %s487 = int_to_ptr.hbm [resolvable:$true] %s486
      %492 = dma.vmem_to_hbm [thread:$0]  %s485, 256, %s487, [#allocation4], 128, 128, 8
    $region65: #{tpu_custom_call.1} parent=1 // pred_fallthru
      _
    // Predicated region
    $region66: #{tpu_custom_call.1} parent=1 // pred_check
      _
    $region67: #{tpu_custom_call.1} parent=1 // pred_check_branch
      %494 = sbr.rel (0) target = $region69
    $region68: #{tpu_custom_call.1} parent=1 // pred_region
      %496 = dma.done [#allocation4], 256
    $region69: #{tpu_custom_call.1} parent=1 // pred_fallthru
      _
    %497 = vsyncpa [#allocation3], 1
    %498 = vsyncpa [#allocation6], 1
    %499 = vsyncpa [#allocation9], 1
    %500 = vsyncpa [#allocation4], 1

</llo_original>
